<compile_context>
chip_gen: v7x
topology: tpu7x:2x2x1
jax: 0.10.0
libtpu: 0.0.40
codegen_flags: <defaults>
</compile_context>

<pallas_src>
import functools
import math

import jax
import jax.numpy as jnp
from jax.experimental import pallas as pl
from jax.experimental.pallas import tpu as pltpu

_LANE = 128


def _sublane_tile(dtype) -> int:
    # 8 for 4-byte types, 16 for 2-byte, 32 for 1-byte (packing along sublanes).
    itemsize = jnp.dtype(dtype).itemsize
    return max(8, 32 // max(itemsize, 1))


def _padded_plane_bytes(h: int, w: int, dtype) -> int:
    """VMEM footprint of an (h, w) plane after (sublane, 128-lane) padding."""
    itemsize = jnp.dtype(dtype).itemsize
    sub = _sublane_tile(dtype)
    hp = -(-h // sub) * sub
    wp = -(-w // _LANE) * _LANE
    return hp * wp * itemsize


def _padded_row_bytes(n: int, dtype) -> int:
    """VMEM footprint of one batch row of a flattened (B, n) array."""
    itemsize = jnp.dtype(dtype).itemsize
    return (-(-n // _LANE) * _LANE) * itemsize


@functools.lru_cache(maxsize=None)
def _vmem_limit_bytes() -> int:
    """Generation-aware scoped-VMEM limit to request from the compiler."""
    phys = None
    try:
        info = pltpu.get_tpu_info()
        phys = getattr(info, "vmem_capacity_bytes", None)
    except Exception:
        phys = None
    if phys is None:
        # Unknown chip: be conservative and assume a v7x-class 64 MiB VMEM.
        phys = 64 * 1024 * 1024
    if phys >= 128 * 1024 * 1024:   # v5e / v6e (128 MiB physical)
        return 64 * 1024 * 1024
    return 32 * 1024 * 1024         # v7x (64 MiB physical) and smaller


def _trim_kernel_3d(x_ref, o_ref):
    # x_ref: (tile_b, h_in_blk, W)   o_ref: (tile_b, h_out, w_out)
    h_out = o_ref.shape[-2]
    w_out = o_ref.shape[-1]
    o_ref[...] = x_ref[:, :h_out, :w_out]


def _trim_kernel_2d(x_ref, o_ref):
    # x_ref: (tile_b, n_in_blk)      o_ref: (tile_b, n_out)   (lane-dense)
    n_out = o_ref.shape[-1]
    o_ref[...] = x_ref[:, :n_out]


def pallas_trim(x, h_out, w_out, *, min_pallas_bytes: int = 512 * 1024):
    """Equivalent of Trim(shape)(x) == x[..., :h_out, :w_out]."""
    if x.ndim < 2:
        raise ValueError("Trim expects an input with at least 2 dimensions")
    *lead, H, W = x.shape
    # torch slicing clamps: x[..., :h, :w] with h >= H keeps all H rows.
    h_out = max(0, min(int(h_out), H))
    w_out = max(0, min(int(w_out), W))
    out_shape_full = tuple(lead) + (h_out, w_out)

    B = int(math.prod(lead)) if lead else 1
    if B == 0 or h_out == 0 or w_out == 0:
        return jnp.zeros(out_shape_full, dtype=x.dtype)

    if h_out == H and w_out == W:
        # No-op trim.
        return x

    dt = x.dtype
    itemsize = jnp.dtype(dt).itemsize
    total_bytes = B * H * W * itemsize
    # Tiny-input fast path: pallas_call launch overhead dwarfs the copy.
    if total_bytes < min_pallas_bytes:
        return x[..., :h_out, :w_out]

    limit = _vmem_limit_bytes()
    budget = int(0.6 * limit)          # headroom under the scoped limit
    sub = _sublane_tile(dt)
    compiler_params = pltpu.CompilerParams(
        dimension_semantics=("parallel",),
        vmem_limit_bytes=limit,
    )

    # ------------------------------------------------------------------
    # H-only trim (w_out == W): flatten last two dims -> lane-dense slab.
    # ------------------------------------------------------------------
    if w_out == W:
        n_in_full = H * W
        n_out = h_out * W
        # Only DMA the kept prefix when it is lane-aligned.
        n_in_blk = n_out if (n_out % _LANE == 0) else n_in_full
        per_b = _padded_row_bytes(n_in_blk, dt) + _padded_row_bytes(n_out, dt)
        fit = budget // (2 * per_b)     # 2x: double-buffered in + out tiles
        if fit >= 1:
            tile_b = min(B, int(fit))
            if B >= 16:
                tile_b = min(tile_b, -(-B // 2))   # keep >=2 steps (v7x: 2 TCs)
            if tile_b >= B:
                tile_b = B
            else:
                # 2-D blocks: second-to-last dim must be 8-aligned (or full B).
                tile_b = (tile_b // 8) * 8
            if tile_b > 0:
                x2 = jnp.reshape(x, (B, n_in_full))
                grid = (pl.cdiv(B, tile_b),)
                y2 = pl.pallas_call(
                    _trim_kernel_2d,
                    out_shape=jax.ShapeDtypeStruct((B, n_out), dt),
                    grid_spec=pltpu.PrefetchScalarGridSpec(
                        num_scalar_prefetch=0,
                        grid=grid,
                        in_specs=[pl.BlockSpec((tile_b, n_in_blk),
                                               lambda i: (i, 0))],
                        out_specs=pl.BlockSpec((tile_b, n_out),
                                               lambda i: (i, 0)),
                    ),
                    compiler_params=compiler_params,
                )(x2)
                return jnp.reshape(y2, out_shape_full)
        # Otherwise fall through to the generic 3-D path.

    # ------------------------------------------------------------------
    # Generic path: crop of the last two dims, batch-tiled grid.
    # ------------------------------------------------------------------
    # Trim the HBM read to the kept rows when sublane-aligned.
    h_in_blk = h_out if (h_out % sub == 0) else H
    per_b = (_padded_plane_bytes(h_in_blk, W, dt)
             + _padded_plane_bytes(h_out, w_out, dt))
    fit = budget // (2 * per_b)
    if fit < 1:
        # A single double-buffered (in + out) plane pair exceeds the VMEM
        # budget; let XLA's fused slice do the strided copy instead.
        return x[..., :h_out, :w_out]
    tile_b = min(B, int(fit))
    if B >= 4:
        tile_b = min(tile_b, -(-B // 4))   # >=4 grid steps: megacore + pipelining
    tile_b = max(1, tile_b)

    x3 = jnp.reshape(x, (B, H, W))
    grid = (pl.cdiv(B, tile_b),)
    y3 = pl.pallas_call(
        _trim_kernel_3d,
        out_shape=jax.ShapeDtypeStruct((B, h_out, w_out), dt),
        grid_spec=pltpu.PrefetchScalarGridSpec(
            num_scalar_prefetch=0,
            grid=grid,
            # Last dim of the input block equals the full W (always legal);
            # the row dim is h_out when sublane-aligned, so discarded rows
            # are never DMA'd from HBM.
            in_specs=[pl.BlockSpec((tile_b, h_in_blk, W),
                                   lambda i: (i, 0, 0))],
            out_specs=pl.BlockSpec((tile_b, h_out, w_out),
                                   lambda i: (i, 0, 0)),
        ),
        compiler_params=compiler_params,
    )(x3)
    return jnp.reshape(y3, out_shape_full)


class Trim:
    """JAX/Pallas analogue of the PyTorch Trim nn.Module."""

    def __init__(self, *shape):
        self.shape = shape

    def __call__(self, x, **kw):
        return pallas_trim(x, self.shape[1], self.shape[2], **kw)


if __name__ == "__main__":
    key = jax.random.PRNGKey(0)
    k1, k2, k3, k4, k5 = jax.random.split(key, 5)

    # 1) Small NCHW input (VAE-decoder overshoot) — default path (tiny-input
    #    fast path) and forced-Pallas path must both match the reference slice.
    x = jax.random.normal(k1, (2, 4, 16, 16), dtype=jnp.float32)
    trim = Trim(1, 14, 14)
    y_fast = jax.block_until_ready(trim(x))
    y_pallas = jax.block_until_ready(trim(x, min_pallas_bytes=0))
    expected = x[..., :14, :14]
    assert y_fast.shape == (2, 4, 14, 14)
    assert y_pallas.shape == (2, 4, 14, 14)
    assert y_fast.dtype == x.dtype and y_pallas.dtype == x.dtype
    assert jnp.array_equal(y_fast, expected)
    assert jnp.array_equal(y_pallas, expected)

    # 2) Docstring-style example: Trim(1, 28, 28) cropping 30x30 planes.
    x2 = jax.random.normal(k2, (2, 1, 30, 30), dtype=jnp.float32)
    y2 = jax.block_until_ready(Trim(1, 28, 28)(x2, min_pallas_bytes=0))
    assert y2.shape == (2, 1, 28, 28)
    assert jnp.array_equal(y2, x2[..., :28, :28])

    # 3) H-only trim (w_out == W): exercises the lane-dense flattened path
    #    with a trimmed (lane-aligned) input read.
    x3 = jax.random.normal(k3, (2, 4, 40, 128), dtype=jnp.float32)
    y3 = jax.block_until_ready(Trim(1, 32, 128)(x3, min_pallas_bytes=0))
    assert y3.shape == (2, 4, 32, 128)
    assert jnp.array_equal(y3, x3[..., :32, :128])

    # 4) Sublane-aligned h_out with a W crop: exercises the trimmed-row read
    #    in the generic 3-D path plus the cdiv (multi-step) grid.
    x4 = jax.random.normal(k4, (4, 4, 40, 40), dtype=jnp.float32)
    y4 = jax.block_until_ready(Trim(1, 32, 24)(x4, min_pallas_bytes=0))
    assert y4.shape == (4, 4, 32, 24)
    assert jnp.array_equal(y4, x4[..., :32, :24])

    # 5) bf16 coverage (sublane tile = 16).
    x5 = jax.random.normal(k5, (2, 4, 24, 24), dtype=jnp.bfloat16)
    y5 = jax.block_until_ready(Trim(1, 16, 16)(x5, min_pallas_bytes=0))
    assert y5.shape == (2, 4, 16, 16) and y5.dtype == jnp.bfloat16
    assert jnp.array_equal(y5, x5[..., :16, :16])

    print("KERNEL_OK")
</pallas_src>

<mosaic_0001>
module attributes {stable_mosaic.version = 11 : i64} {
  func.func @_trim_kernel_3d(%arg0: i32, %arg1: memref<2x16x16xf32, #tpu.memory_space<vmem>>, %arg2: memref<2x14x14xf32, #tpu.memory_space<vmem>>) attributes {dimension_semantics = [#tpu.dimension_semantics<parallel>], iteration_bounds = array<i64: 4>, scalar_prefetch = 0 : i64, scratch_operands = 0 : i64, tpu.core_type = #tpu.core_type<tc>, window_params = [{transform_indices = @transform_0, window_bounds = array<i64: 2, 16, 16>}, {transform_indices = @transform_1, window_bounds = array<i64: 2, 14, 14>}]} {
    %c0 = arith.constant 0 : index
    %c0_0 = arith.constant 0 : index
    %c0_1 = arith.constant 0 : index
    %0 = vector.load %arg1[%c0, %c0_0, %c0_1] : memref<2x16x16xf32, #tpu.memory_space<vmem>>, vector<2x14x14xf32>
    %c0_2 = arith.constant 0 : index
    %c0_3 = arith.constant 0 : index
    %c0_4 = arith.constant 0 : index
    %1 = vector.load %arg2[%c0_2, %c0_3, %c0_4] : memref<2x14x14xf32, #tpu.memory_space<vmem>>, vector<2x14x14xf32>
    tpu.vector_store %arg2[%c0_2, %c0_3, %c0_4], %0 {strides = array<i32>} : memref<2x14x14xf32, #tpu.memory_space<vmem>>, vector<2x14x14xf32>,
    return
  }
  func.func @transform_0(%arg0: i32) -> (i32, i32, i32) {
    %c0_i32 = arith.constant 0 : i32
    %c0_i32_0 = arith.constant 0 : i32
    %c0_i32_1 = arith.constant 0 : i32
    return %arg0, %c0_i32, %c0_i32_0 : i32, i32, i32
  }
  func.func @transform_1(%arg0: i32) -> (i32, i32, i32) {
    %c0_i32 = arith.constant 0 : i32
    %c0_i32_0 = arith.constant 0 : i32
    %c0_i32_1 = arith.constant 0 : i32
    return %arg0, %c0_i32, %c0_i32_0 : i32, i32, i32
  }
}

</mosaic_0001>

<llo_original>
// kernel: tpu_custom_call.1
$region0: #{tpu_custom_call.1}
  #allocation0 [shape = 'u32[]', space=smem, size = 0x4, offset = 0x4, fixed_abs, tag = 'smem constant byte address 0x4 - core index']
  #allocation1 [shape = 'u32[144,128]{1,0:T(1,128)}', space=vmem, size = 0x12000, scoped, tag = 'internal scratch']
  %s0 = inlined_call_operand.hbm [shape: f32[8,16,16], index: 0, kind: input, shape index: {}]
  %s1 = inlined_call_operand.vmem [shape: f32[8,14,14], index: 1, kind: output, shape index: {}]
  %s2 = sld [smem:[#allocation0]]
  $region41: #{tpu_custom_call.1} parent=0
    _
  %s4 = ssub.s32 1, %s2
  %s5 = scalar_select 0, %s4, %s2
  $region1: #{tpu_custom_call.1} parent=0
    #allocation2 [shape = 'u8[32768]{0}', space=vmem, size = 0x8000, scoped, tag = 'input window, operand 0']
    #allocation3 [shape = 's32[2]{0}', space=sflag, size = 0x8, scoped, tag = 'scoped memory for tpu_custom_call.1']
    %6 = vsyncpa [#allocation3], 0
    %s7 = scalar_lea.sflag [#allocation3], 1
    %8 = vsyncpa %s7, 0
    loop: start=0, step=1, limit=6
    $region2: #{tpu_custom_call.1} parent=1 // loop_pre_header
      _
    $region3: #{tpu_custom_call.1} parent=1 // loop_header
      %s10 = sphi 0, %s14
      %p11 = scmp.ge.s32.totalorder %s10, 6
      %s20 = sphi 0, %s22
      %s23 = sphi 0, %s20
      %s24 = sphi 0, %s23
      %s40 = sphi 0, %s24
      %s46 = sphi 0, %s48
      %s49 = sphi 0, %s46
      %s50 = sphi 0, %s49
      %s66 = sphi 0, %s50
    $region4: #{tpu_custom_call.1} parent=1 // loop_header_branch
      %13 = sbr.rel (%p11) target = $region8
    $region5: #{tpu_custom_call.1} parent=1 // loop_body
      %s15 = ssub.s32 %s10, 1
      %s16 = ssub.s32 %s10, 2
      %s17 = sadd.s32 %s10, 1
      %s18 = ssub.s32 %s10, %s17
      %p19 = scmp.eq.s32.totalorder %s18, 0
      %s21 = sadd.s32 %s20, 1
      %s22 = scalar_select %p19, %s20, %s21
      %p25 = pneg %p19
      %p26 = scmp.eq.s32.totalorder %s10, 3
      %p27 = por %p25, %p26
      %p28 = scmp.ne.s32.totalorder %s20, %s23
      %p29 = scmp.eq.s32.totalorder %s10, 0
      %p30 = por %p28, %p29
      %p31 = scmp.ne.s32.totalorder %s20, %s23
      %p32 = scmp.eq.s32.totalorder %s15, 3
      %p33 = por %p31, %p32
      %p34 = scmp.ne.s32.totalorder %s23, %s24
      %p35 = scmp.eq.s32.totalorder %s15, 0
      %p36 = por %p34, %p35
      %p37 = scmp.ne.s32.totalorder %s23, %s24
      %p38 = scmp.eq.s32.totalorder %s16, 3
      %p39 = por %p37, %p38
      %p41 = scmp.ne.s32.totalorder %s24, %s40
      %p42 = scmp.eq.s32.totalorder %s16, 0
      %p43 = por %p41, %p42
      %s44 = ssub.s32 %s10, %s17
      %p45 = scmp.eq.s32.totalorder %s44, 0
      %s47 = sadd.s32 %s46, 1
      %s48 = scalar_select %p45, %s46, %s47
      %p51 = pneg %p45
      %p52 = scmp.eq.s32.totalorder %s10, 3
      %p53 = por %p51, %p52
      %p54 = scmp.ne.s32.totalorder %s46, %s49
      %p55 = scmp.eq.s32.totalorder %s10, 0
      %p56 = por %p54, %p55
      %p57 = scmp.ne.s32.totalorder %s46, %s49
      %p58 = scmp.eq.s32.totalorder %s15, 3
      %p59 = por %p57, %p58
      %p60 = scmp.ne.s32.totalorder %s49, %s50
      %p61 = scmp.eq.s32.totalorder %s15, 0
      %p62 = por %p60, %p61
      %p63 = scmp.ne.s32.totalorder %s49, %s50
      %p64 = scmp.eq.s32.totalorder %s16, 3
      %p65 = por %p63, %p64
      %p67 = scmp.ne.s32.totalorder %s50, %s66
      %p68 = scmp.eq.s32.totalorder %s16, 0
      %p69 = por %p67, %p68
      %p70 = scmp.le.s32.totalorder 1, %s10
      %p71 = scmp.lt.s32.totalorder %s10, 5
      %p72 = pnand %p70, %p71
      %p73 = pneg %p72
      // Predicated region
      $region9: #{tpu_custom_call.1} parent=5 // pred_check
        _
      $region10: #{tpu_custom_call.1} parent=5 // pred_check_branch
        %75 = sbr.rel (%p72) target = $region12
      $region11: #{tpu_custom_call.1} parent=5 // pred_region
        %s76 = ssub.s32 %s10, 1
      $region12: #{tpu_custom_call.1} parent=5 // pred_fallthru
        _
      %p77 = scmp.lt.s32.totalorder %s10, 4
      // Predicated region
      $region13: #{tpu_custom_call.1} parent=5 // pred_check
        %p78 = pneg %p77
      $region14: #{tpu_custom_call.1} parent=5 // pred_check_branch
        %80 = sbr.rel (%p78) target = $region16
      $region15: #{tpu_custom_call.1} parent=5 // pred_region
        // Predicated region
        $region17: #{tpu_custom_call.1} parent=15 // pred_check
          %p81 = pneg %p30
        $region18: #{tpu_custom_call.1} parent=15 // pred_check_branch
          %83 = sbr.rel (%p81) target = $region20
        $region19: #{tpu_custom_call.1} parent=15 // pred_region
          %s84 = sand.u32 %s20, 1
          %s85 = scalar_lea.sflag [#allocation3], %s84
          %s86 = sand.u32 %s20, 1
          %s87 = smul.addr %s86, 32
          %s88 = scalar_lea.vmem [#allocation2], %s87
          %s89 = smul.u32 2, %s10
          %s91 = ssub.s32 512, 512
          %92 = vsyncadd %s85, %s91
          %s93 = smul.addr %s89, 2
          %s94 = smul.addr %s93, 128
          %s95 = scalar_lea.hbm %s0, %s94
          %s96 = sshll.u32 %s88, 4
          %s97 = int_to_ptr.vmem [resolvable:$true] %s96
          %102 = dma.hbm_to_vmem [thread:$0]  %s95, 512, %s97, %s85, 128, 128, 8
        $region20: #{tpu_custom_call.1} parent=15 // pred_fallthru
          _
      $region16: #{tpu_custom_call.1} parent=5 // pred_fallthru
        _
      %p103 = scmp.le.s32.totalorder 1, %s10
      %p104 = scmp.lt.s32.totalorder %s10, 5
      %p105 = pnand %p103, %p104
      %p106 = pneg %p105
      // Predicated region
      $region21: #{tpu_custom_call.1} parent=5 // pred_check
        _
      $region22: #{tpu_custom_call.1} parent=5 // pred_check_branch
        %108 = sbr.rel (%p105) target = $region24
      $region23: #{tpu_custom_call.1} parent=5 // pred_region
        %s109 = ssub.s32 %s10, 1
        %s110 = sand.u32 %s23, 1
        %s111 = scalar_lea.sflag [#allocation3], %s110
        %s112 = sand.u32 %s23, 1
        %s113 = smul.addr %s112, 32
        %s114 = scalar_lea.vmem [#allocation2], %s113
        // Predicated region
        $region25: #{tpu_custom_call.1} parent=23 // pred_check
          %p115 = pneg %p36
        $region26: #{tpu_custom_call.1} parent=23 // pred_check_branch
          %117 = sbr.rel (%p115) target = $region28
        $region27: #{tpu_custom_call.1} parent=23 // pred_region
          %118 = dma.done %s111, 512
        $region28: #{tpu_custom_call.1} parent=23 // pred_fallthru
          _
        %s119 = sand.u32 %s23, 1
        %s120 = scalar_lea.sflag [#allocation3], %s119
        %s121 = sand.u32 %s23, 1
        %s122 = smul.addr %s121, 32
        %s123 = scalar_lea.vmem [#allocation2], %s122
        %p124 = pneg %p36
        %p125 = pneg %p33
        %p126 = pneg %p62
        %p127 = pneg %p59
        %s128 = smul.u32 2, %s15
        %p129 = scmp.lt.s32.totalorder %s128, 7
        %s130 = scalar_select %p129, %s128, 7
        %s131 = smul.addr %s130, 2
        %s132 = smul.addr %s131, 8
        %s133 = scalar_lea.vmem %s1, %s132
        %s134 = smul.u32 2, %s15
        %s135 = smul.u32 2, %s15
        %p136 = scmp.lt.s32.totalorder %s135, 7
        %s137 = scalar_select %p136, %s135, 7
        %s138 = smul.addr %s137, 2
        %s139 = smul.addr %s138, 8
        %s140 = scalar_lea.vmem %s1, %s139
        %s141 = smul.u32 2, %s15
        %v142 = vld [vmem:[%s114] sm:$0xff]
        %v143 = vld [vmem:[%s114 + $0x8] sm:$0x3f]
        %v144 = vld [vmem:[%s114 + $0x10] sm:$0xff]
        %v145 = vld [vmem:[%s114 + $0x18] sm:$0x3f]
        %vm146 = vcmask 113664
        %147 = vst.msk [vmem:[%s140] sm:$0xff] %vm146, %v142
        %vm148 = vcmask 111616
        %149 = vst.msk [vmem:[%s140 + $0x8] sm:$0x3f] %vm148, %v143
        %150 = vst.msk [vmem:[%s140 + $0x10] sm:$0xff] %vm146, %v144
        %151 = vst.msk [vmem:[%s140 + $0x18] sm:$0x3f] %vm148, %v145
        %s152 = smul.u32 2, %s15
        %p153 = scmp.lt.s32.totalorder %s152, 7
        %s154 = scalar_select %p153, %s152, 7
        %s155 = smul.addr %s154, 2
        %s156 = smul.addr %s155, 8
        %s157 = scalar_lea.vmem %s1, %s156
        // Predicated region
        $region29: #{tpu_custom_call.1} parent=23 // pred_check
          %p158 = pneg %p59
        $region30: #{tpu_custom_call.1} parent=23 // pred_check_branch
          %160 = sbr.rel (%p158) target = $region32
        $region31: #{tpu_custom_call.1} parent=23 // pred_region
          %s161 = smul.u32 2, %s15
        $region32: #{tpu_custom_call.1} parent=23 // pred_fallthru
          _
      $region24: #{tpu_custom_call.1} parent=5 // pred_fallthru
        _
      %p162 = scmp.le.s32.totalorder 2, %s10
      // Predicated region
      $region33: #{tpu_custom_call.1} parent=5 // pred_check
        %p163 = pneg %p162
      $region34: #{tpu_custom_call.1} parent=5 // pred_check_branch
        %165 = sbr.rel (%p163) target = $region36
      $region35: #{tpu_custom_call.1} parent=5 // pred_region
        %s166 = ssub.s32 %s10, 2
        // Predicated region
        $region37: #{tpu_custom_call.1} parent=35 // pred_check
          %p167 = pneg %p65
        $region38: #{tpu_custom_call.1} parent=35 // pred_check_branch
          %169 = sbr.rel (%p167) target = $region40
        $region39: #{tpu_custom_call.1} parent=35 // pred_region
          %s170 = smul.u32 2, %s16
          %p171 = scmp.lt.s32.totalorder %s170, 7
          %s172 = scalar_select %p171, %s170, 7
          %s173 = smul.addr %s172, 2
          %s174 = smul.addr %s173, 8
          %s175 = scalar_lea.vmem %s1, %s174
        $region40: #{tpu_custom_call.1} parent=35 // pred_fallthru
          _
      $region36: #{tpu_custom_call.1} parent=5 // pred_fallthru
        _
    $region6: #{tpu_custom_call.1} parent=1 // loop_footer
      %s14 = sadd.s32 1, %s10
    $region7: #{tpu_custom_call.1} parent=1 // loop_footer_branch
      %9 = sbr.rel target = $region3
    $region8: #{tpu_custom_call.1} parent=1 // loop_exit
      _
    %176 = vsyncpa [#allocation3], 1
    %s177 = scalar_lea.sflag [#allocation3], 1
    %178 = vsyncpa %s177, 1

</llo_original>
